<compile_context>
chip_gen: v5e
topology: v5e:2x2
jax: 0.10.0
libtpu: 0.0.40
codegen_flags: <defaults>
</compile_context>

<pallas_src>
import jax
import jax.numpy as jnp
from jax.experimental import pallas as pl
from jax.experimental.pallas import tpu as pltpu

LATENT_DIM = 3
HIDDEN_DIM = 20
OUT_DIM = 784
OUT_DIM_PADDED = 896   # 7 * 128 -> lane-dense output stores (opt-in only)


def _round_up(x, m):
    return ((x + m - 1) // m) * m


def _vae_decoder_kernel(z_ref, w_ref, b_ref, out_ref):
    # (TILE_B, 3) @ (3, N) + (1, N): single MXU pass, f32 accumulation.
    logits = jnp.dot(z_ref[...], w_ref[...],
                     preferred_element_type=jnp.float32) + b_ref[...]
    # sigmoid(x) = 0.5 * tanh(0.5 * x) + 0.5 : one EUP push per vreg (tanh);
    # the mul/add ride free on idle VALU slots under the HBM write.
    p = 0.5 * jnp.tanh(0.5 * logits) + 0.5
    out_ref[...] = p.astype(out_ref.dtype)


def fold_decoder_params(w1, b1, w2, b2, *, lane_pad=False):
    """Fold d1/d2 into one affine map (exact: d1 has no activation).

    In deployment precompute this once; the fold is a tiny (3x20)@(20x784)
    matmul.  With lane_pad=True the extra 784:896 columns get bias=-30 so the
    saturated sigmoid writes exactly 0.0 there (not 0.5)."""
    W = jnp.dot(w1, w2)           # (3, 784)
    b = jnp.dot(b1, w2) + b2      # (1, 784)
    if lane_pad:
        pad = OUT_DIM_PADDED - OUT_DIM
        W = jnp.pad(W, ((0, 0), (0, pad)))
        b = jnp.pad(b, ((0, 0), (0, pad)), constant_values=-30.0)
    return W, b


def vae_forward(z, w1, b1, w2, b2, *, tile_b=1024, out_dtype=jnp.float32,
                keep_padded=False):
    """Decoder forward pass: sigmoid(d2(d1(z))) via one Pallas kernel.

    tile_b      : max batch rows per grid step (multiple of 8).  1024 keeps
                  double-buffered output tiles well under v7x's scoped VMEM;
                  on v5e/v6e it can be raised further with vmem_limit_bytes.
    out_dtype   : jnp.float32 (PyTorch-comparable, default) or jnp.bfloat16
                  (recommended deployed setting: halves the dominant HBM write;
                  matmul accumulation stays f32).
    keep_padded : return a lane-dense (B, 896) result (padded cols are 0.0)
                  instead of the exact (B, 784).  Default False: the kernel
                  writes 784-wide directly, no pad + no XLA slice pass.
    """
    B = z.shape[0]
    W, b = fold_decoder_params(w1, b1, w2, b2, lane_pad=keep_padded)
    n_out = W.shape[1]

    # Batch tiling: tb is a multiple of 8 (sublane), derived from B so the
    # batch-tail pad (pure wasted HBM write) stays small for mid-size batches.
    tb = min(int(tile_b), _round_up(B, 8))
    tb = max(8, (tb // 8) * 8)
    b_pad = _round_up(B, tb)
    if b_pad != B:
        z = jnp.pad(z, ((0, b_pad - B), (0, 0)))

    out = pl.pallas_call(
        _vae_decoder_kernel,
        out_shape=jax.ShapeDtypeStruct((b_pad, n_out), out_dtype),
        grid_spec=pltpu.PrefetchScalarGridSpec(
            num_scalar_prefetch=0,
            grid=(b_pad // tb,),
            in_specs=[
                pl.BlockSpec((tb, LATENT_DIM), lambda i: (i, 0)),     # z tile
                pl.BlockSpec((LATENT_DIM, n_out), lambda i: (0, 0)),  # W (VMEM-resident)
                pl.BlockSpec((1, n_out), lambda i: (0, 0)),           # b (VMEM-resident)
            ],
            out_specs=pl.BlockSpec((tb, n_out), lambda i: (i, 0)),
        ),
        # Batch axis is independent -> shard across TensorCores where the
        # chip has more than one (v7x).
        # TODO(synk): verify in xprof that both v7x TCs are active; if not,
        # switch this axis to pltpu.CORE_PARALLEL.
        compiler_params=pltpu.CompilerParams(
            dimension_semantics=("parallel",)),
    )(z, W, b)

    if b_pad != B:
        out = out[:B]
    return out


def init_params(key):
    """Deterministic init mimicking torch.nn.Linear (U[-1/sqrt(fan_in), ..]).

    Weights are stored [in, out] (transposed vs. PyTorch's [out, in])."""
    k1, k2, k3, k4 = jax.random.split(key, 4)
    bound1 = 1.0 / jnp.sqrt(LATENT_DIM)
    bound2 = 1.0 / jnp.sqrt(HIDDEN_DIM)
    w1 = jax.random.uniform(k1, (LATENT_DIM, HIDDEN_DIM), jnp.float32,
                            -bound1, bound1)
    b1 = jax.random.uniform(k2, (1, HIDDEN_DIM), jnp.float32, -bound1, bound1)
    w2 = jax.random.uniform(k3, (HIDDEN_DIM, OUT_DIM), jnp.float32,
                            -bound2, bound2)
    b2 = jax.random.uniform(k4, (1, OUT_DIM), jnp.float32, -bound2, bound2)
    return w1, b1, w2, b2


def vae_forward_ref(z, w1, b1, w2, b2):
    """Pure-JAX reference (two-step, exactly as the PyTorch forward)."""
    h = z @ w1 + b1
    return jax.nn.sigmoid(h @ w2 + b2)


if __name__ == "__main__":
    key = jax.random.PRNGKey(0)
    kz, kp = jax.random.split(key)
    w1, b1, w2, b2 = init_params(kp)

    # B=8 is the small canonical test; B=20 exercises the batch-tail padding
    # path (B not a multiple of 8).
    for B in (8, 20):
        z = jax.random.normal(jax.random.fold_in(kz, B),
                              (B, LATENT_DIM), jnp.float32)
        ref = vae_forward_ref(z, w1, b1, w2, b2)

        # Default path: exact 784-wide f32 output, tanh-based sigmoid.
        out = jax.block_until_ready(vae_forward(z, w1, b1, w2, b2))
        assert out.shape == (B, OUT_DIM), out.shape
        err = float(jnp.max(jnp.abs(out - ref)))
        assert err < 1e-5, f"f32 mismatch vs reference: max abs err {err}"

    # bf16-output path (deployed setting): halves the HBM write.
    z8 = jax.random.normal(jax.random.fold_in(kz, 8), (8, LATENT_DIM),
                           jnp.float32)
    ref8 = vae_forward_ref(z8, w1, b1, w2, b2)
    out_bf16 = jax.block_until_ready(
        vae_forward(z8, w1, b1, w2, b2, out_dtype=jnp.bfloat16))
    err = float(jnp.max(jnp.abs(out_bf16.astype(jnp.float32) - ref8)))
    assert err < 2e-2, f"bf16 mismatch vs reference: max abs err {err}"

    # Opt-in lane-dense padded output: columns 784:896 are exactly 0.0.
    out_pad = jax.block_until_ready(
        vae_forward(z8, w1, b1, w2, b2, keep_padded=True))
    assert out_pad.shape == (8, OUT_DIM_PADDED), out_pad.shape
    err = float(jnp.max(jnp.abs(out_pad[:, :OUT_DIM] - ref8)))
    assert err < 1e-5, f"padded-path mismatch: max abs err {err}"
    assert float(jnp.max(jnp.abs(out_pad[:, OUT_DIM:]))) == 0.0

    print("KERNEL_OK")
</pallas_src>

<mosaic_0001>
module attributes {stable_mosaic.version = 11 : i64} {
  func.func @_vae_decoder_kernel(%arg0: i32, %arg1: memref<8x3xf32, #tpu.memory_space<vmem>>, %arg2: memref<3x784xf32, #tpu.memory_space<vmem>>, %arg3: memref<1x784xf32, #tpu.memory_space<vmem>>, %arg4: memref<8x784xf32, #tpu.memory_space<vmem>>) attributes {dimension_semantics = [#tpu.dimension_semantics<parallel>], iteration_bounds = array<i64: 1>, scalar_prefetch = 0 : i64, scratch_operands = 0 : i64, tpu.core_type = #tpu.core_type<tc>, window_params = [{transform_indices = @transform_0, window_bounds = array<i64: 8, 3>}, {pipeline_mode = #tpu.pipeline_mode<synchronous>, transform_indices = @transform_1, window_bounds = array<i64: 3, 784>}, {pipeline_mode = #tpu.pipeline_mode<synchronous>, transform_indices = @transform_2, window_bounds = array<i64: 1, 784>}, {transform_indices = @transform_3, window_bounds = array<i64: 8, 784>}]} {
    %c0 = arith.constant 0 : index
    %c0_0 = arith.constant 0 : index
    %0 = vector.load %arg1[%c0, %c0_0] : memref<8x3xf32, #tpu.memory_space<vmem>>, vector<8x3xf32>
    %c0_1 = arith.constant 0 : index
    %c0_2 = arith.constant 0 : index
    %1 = vector.load %arg2[%c0_1, %c0_2] : memref<3x784xf32, #tpu.memory_space<vmem>>, vector<3x784xf32>
    %cst = arith.constant dense<0.000000e+00> : vector<8x784xf32>
    %2 = tpu.matmul %0, %1, %cst {dimension_numbers = #tpu.dot_dimension_numbers<[1], [0], [0], [1], [0, 0, 1, 1], [], []>} : vector<8x3xf32>, vector<3x784xf32>, vector<8x784xf32> -> vector<8x784xf32>
    %c0_3 = arith.constant 0 : index
    %c0_4 = arith.constant 0 : index
    %3 = vector.load %arg3[%c0_3, %c0_4] : memref<1x784xf32, #tpu.memory_space<vmem>>, vector<1x784xf32>
    %4 = vector.broadcast %3 : vector<1x784xf32> to vector<8x784xf32>
    %5 = arith.addf %2, %4 : vector<8x784xf32>
    %cst_5 = arith.constant 5.000000e-01 : f32
    %6 = vector.broadcast %cst_5 : f32 to vector<8x784xf32>
    %7 = arith.mulf %6, %5 : vector<8x784xf32>
    %8 = math.tanh %7 : vector<8x784xf32>
    %cst_6 = arith.constant 5.000000e-01 : f32
    %9 = vector.broadcast %cst_6 : f32 to vector<8x784xf32>
    %10 = arith.mulf %9, %8 : vector<8x784xf32>
    %cst_7 = arith.constant 5.000000e-01 : f32
    %11 = vector.broadcast %cst_7 : f32 to vector<8x784xf32>
    %12 = arith.addf %10, %11 : vector<8x784xf32>
    %c0_8 = arith.constant 0 : index
    %c0_9 = arith.constant 0 : index
    %13 = vector.load %arg4[%c0_8, %c0_9] : memref<8x784xf32, #tpu.memory_space<vmem>>, vector<8x784xf32>
    tpu.vector_store %arg4[%c0_8, %c0_9], %12 {strides = array<i32>} : memref<8x784xf32, #tpu.memory_space<vmem>>, vector<8x784xf32>,
    return
  }
  func.func @transform_0(%arg0: i32) -> (i32, i32) {
    %c0_i32 = arith.constant 0 : i32
    %c0_i32_0 = arith.constant 0 : i32
    return %arg0, %c0_i32 : i32, i32
  }
  func.func @transform_1(%arg0: i32) -> (i32, i32) {
    %c0_i32 = arith.constant 0 : i32
    %c0_i32_0 = arith.constant 0 : i32
    %c0_i32_1 = arith.constant 0 : i32
    return %c0_i32, %c0_i32_0 : i32, i32
  }
  func.func @transform_2(%arg0: i32) -> (i32, i32) {
    %c0_i32 = arith.constant 0 : i32
    %c0_i32_0 = arith.constant 0 : i32
    %c0_i32_1 = arith.constant 0 : i32
    return %c0_i32, %c0_i32_0 : i32, i32
  }
  func.func @transform_3(%arg0: i32) -> (i32, i32) {
    %c0_i32 = arith.constant 0 : i32
    %c0_i32_0 = arith.constant 0 : i32
    return %arg0, %c0_i32 : i32, i32
  }
}

</mosaic_0001>

<llo_original>
// kernel: tpu_custom_call.1
$region0: #{tpu_custom_call.1}
  #allocation0 [shape = 'u32[]', space=smem, size = 0x4, offset = 0x4, fixed_abs, tag = 'smem constant byte address 0x4 - core index']
  #allocation1 [shape = 'u32[72,128]{1,0:T(1,128)}', space=vmem, size = 0x9000, scoped, tag = 'internal scratch']
  %s0 = inlined_call_operand.vmem [shape: f32[8,3], index: 0, kind: input, shape index: {}]
  %s1 = inlined_call_operand.hbm [shape: f32[3,784], index: 1, kind: input, shape index: {}]
  %s2 = inlined_call_operand.vmem [shape: f32[1,784], index: 2, kind: input, shape index: {}]
  %s3 = inlined_call_operand.hbm [shape: f32[8,784], index: 3, kind: output, shape index: {}]
  %s4 = sld [smem:[#allocation0]]
  $region26: #{tpu_custom_call.1} parent=0
    _
  %s6 = ssub.s32 1, %s4
  %s7 = scalar_select 0, %s6, %s4
  $region1: #{tpu_custom_call.1} parent=0
    #allocation2 [shape = 'u8[14336]{0}', space=vmem, size = 0x3800, scoped, tag = 'input window, operand 1, single buffered']
    #allocation3 [shape = 's32[1]{0}', space=sflag, size = 0x4, scoped, tag = 'scoped memory for tpu_custom_call.1']
    #allocation4 [shape = 's32[1]{0}', space=sflag, size = 0x4, scoped, tag = 'scoped memory for tpu_custom_call.1']
    #allocation5 [shape = 'u8[28672]{0}', space=vmem, size = 0x7000, scoped, tag = 'output window, operand 0, single buffered']
    %8 = vsyncpa [#allocation3], 0
    %9 = vsyncpa [#allocation4], 0
    // Predicated region
    $region2: #{tpu_custom_call.1} parent=1 // pred_check
      _
    $region3: #{tpu_custom_call.1} parent=1 // pred_check_branch
      %11 = sbr.rel (0) target = $region5
    $region4: #{tpu_custom_call.1} parent=1 // pred_region
      _
    $region5: #{tpu_custom_call.1} parent=1 // pred_fallthru
      _
    // Predicated region
    $region6: #{tpu_custom_call.1} parent=1 // pred_check
      _
    $region7: #{tpu_custom_call.1} parent=1 // pred_check_branch
      %13 = sbr.rel (0) target = $region9
    $region8: #{tpu_custom_call.1} parent=1 // pred_region
      %15 = vsyncadd [#allocation3], 0
      %s17 = sshll.u32 %s1, 4
      %s18 = int_to_ptr.hbm [resolvable:$true] %s17
      %s19 = sshll.u32 [#allocation2], 4
      %s20 = int_to_ptr.vmem [resolvable:$true] %s19
      %22 = dma.hbm_to_vmem [thread:$0]  %s18, 448, %s20, [#allocation3]
    $region9: #{tpu_custom_call.1} parent=1 // pred_fallthru
      _
    // Predicated region
    $region10: #{tpu_custom_call.1} parent=1 // pred_check
      _
    $region11: #{tpu_custom_call.1} parent=1 // pred_check_branch
      %24 = sbr.rel (0) target = $region13
    $region12: #{tpu_custom_call.1} parent=1 // pred_region
      _
    $region13: #{tpu_custom_call.1} parent=1 // pred_fallthru
      _
    // Predicated region
    $region14: #{tpu_custom_call.1} parent=1 // pred_check
      _
    $region15: #{tpu_custom_call.1} parent=1 // pred_check_branch
      %26 = sbr.rel (0) target = $region17
    $region16: #{tpu_custom_call.1} parent=1 // pred_region
      %28 = dma.done [#allocation3], 448
    $region17: #{tpu_custom_call.1} parent=1 // pred_fallthru
      _
    %v29 = vld [vmem:[%s0] sm:$0xff]
    %v30 = vld [vmem:[#allocation2] sm:$0x77]
    %v31 = vld [vmem:[#allocation2 + $0x8] sm:$0x77]
    %v32 = vld [vmem:[#allocation2 + $0x10] sm:$0x77]
    %v33 = vld [vmem:[#allocation2 + $0x18] sm:$0x7]
    %v34 = vld [vmem:[%s2] sm:$0x7f]
    %v36 = vperm.slane %v34, 0
    %v37 = vperm.slane %v34, 1
    %v38 = vperm.slane %v34, 2
    %v39 = vperm.slane %v34, 3
    %v40 = vperm.slane %v34, 4
    %v41 = vperm.slane %v34, 5
    %v42 = vperm.slane %v34, 6
    %54 = vst [vmem:[#allocation1] ss:$2 sm:$0xff] %v30
    %s55 = scalar_lea.vmem [#allocation1], 16
    %56 = vst [vmem:[%s55] ss:$2 sm:$0xff] %v31
    %s57 = scalar_lea.vmem [#allocation1], 32
    %58 = vst [vmem:[%s57] ss:$2 sm:$0xff] %v32
    %s59 = scalar_lea.vmem [#allocation1], 48
    %60 = vst [vmem:[%s59] ss:$2 sm:$0xff] %v33
    %v61 = vld.sshfl [vmem:[#allocation1] sm:$0xff pattern:$0x75316420]
    %v62 = vld.sshfl [vmem:[#allocation1 + $0x8] sm:$0xff pattern:$0x75316420]
    %v63 = vld.sshfl [vmem:[#allocation1 + $0x10] sm:$0xff pattern:$0x75316420]
    %v64 = vld.sshfl [vmem:[#allocation1 + $0x18] sm:$0xff pattern:$0x75316420]
    %v65 = vld.sshfl [vmem:[#allocation1 + $0x20] sm:$0xff pattern:$0x75316420]
    %v66 = vld.sshfl [vmem:[#allocation1 + $0x28] sm:$0xff pattern:$0x75316420]
    %v67 = vld.sshfl [vmem:[#allocation1 + $0x30] sm:$0xff pattern:$0x75316420]
    %vm68 = vcmask 23552
    %v70 = vsel %vm68, %v29, 0
    %vm72 = vcmask 1042432
    %v73 = vsel %vm72, %v61, 0
    %v75 = vsel %vm72, %v62, 0
    %v77 = vsel %vm72, %v63, 0
    %v79 = vsel %vm72, %v64, 0
    %v81 = vsel %vm72, %v65, 0
    %v83 = vsel %vm72, %v66, 0
    %v85 = vsel %vm72, %v67, 0
    %87 = vmatpush.msra.mxu0 0.0
    %88 = vmatpush.msra.mxu0 0.0
    %89 = vmatpush.msra.mxu0 0.0
    %90 = vmatpush.msra.mxu0 0.0
    %91 = vmatpush.msra.mxu0 0.0
    %92 = vmatpush.msra.mxu0 0.0
    %93 = vmatpush.msra.mxu0 0.0
    %94 = vmatpush.msra.mxu0 0.0
    %95 = vmatpush.msra.mxu0 0.0
    %96 = vmatpush.msra.mxu0 0.0
    %97 = vmatpush.msra.mxu0 0.0
    %98 = vmatpush.msra.mxu0 0.0
    %99 = vmatpush.msra.mxu0 0.0
    %100 = vmatpush.msra.mxu0 0.0
    %101 = vmatpush.msra.mxu0 0.0
    %102 = vmatpush.msra.mxu0 %v73
    %103 = vmatmul.f32.gmra.mxu0 %v70
    %v104 = vpop.f32.mrf.mxu0
    %v105 = vadd.f32 %v36, %v104
    %106 = vdwg.mxu0
    %107 = vmatpush.msra.mxu0 0.0
    %108 = vmatpush.msra.mxu0 0.0
    %109 = vmatpush.msra.mxu0 0.0
    %110 = vmatpush.msra.mxu0 0.0
    %111 = vmatpush.msra.mxu0 0.0
    %112 = vmatpush.msra.mxu0 0.0
    %113 = vmatpush.msra.mxu0 0.0
    %114 = vmatpush.msra.mxu0 0.0
    %115 = vmatpush.msra.mxu0 0.0
    %116 = vmatpush.msra.mxu0 0.0
    %117 = vmatpush.msra.mxu0 0.0
    %118 = vmatpush.msra.mxu0 0.0
    %119 = vmatpush.msra.mxu0 0.0
    %120 = vmatpush.msra.mxu0 0.0
    %121 = vmatpush.msra.mxu0 0.0
    %122 = vmatpush.msra.mxu0 %v75
    %123 = vmatmul.f32.gmra.mxu0 %v70
    %v124 = vpop.f32.mrf.mxu0
    %v125 = vadd.f32 %v37, %v124
    %126 = vdwg.mxu0
    %127 = vmatpush.msra.mxu0 0.0
    %128 = vmatpush.msra.mxu0 0.0
    %129 = vmatpush.msra.mxu0 0.0
    %130 = vmatpush.msra.mxu0 0.0
    %131 = vmatpush.msra.mxu0 0.0
    %132 = vmatpush.msra.mxu0 0.0
    %133 = vmatpush.msra.mxu0 0.0
    %134 = vmatpush.msra.mxu0 0.0
    %135 = vmatpush.msra.mxu0 0.0
    %136 = vmatpush.msra.mxu0 0.0
    %137 = vmatpush.msra.mxu0 0.0
    %138 = vmatpush.msra.mxu0 0.0
    %139 = vmatpush.msra.mxu0 0.0
    %140 = vmatpush.msra.mxu0 0.0
    %141 = vmatpush.msra.mxu0 0.0
    %142 = vmatpush.msra.mxu0 %v77
    %143 = vmatmul.f32.gmra.mxu0 %v70
    %v144 = vpop.f32.mrf.mxu0
    %v145 = vadd.f32 %v38, %v144
    %146 = vdwg.mxu0
    %147 = vmatpush.msra.mxu0 0.0
    %148 = vmatpush.msra.mxu0 0.0
    %149 = vmatpush.msra.mxu0 0.0
    %150 = vmatpush.msra.mxu0 0.0
    %151 = vmatpush.msra.mxu0 0.0
    %152 = vmatpush.msra.mxu0 0.0
    %153 = vmatpush.msra.mxu0 0.0
    %154 = vmatpush.msra.mxu0 0.0
    %155 = vmatpush.msra.mxu0 0.0
    %156 = vmatpush.msra.mxu0 0.0
    %157 = vmatpush.msra.mxu0 0.0
    %158 = vmatpush.msra.mxu0 0.0
    %159 = vmatpush.msra.mxu0 0.0
    %160 = vmatpush.msra.mxu0 0.0
    %161 = vmatpush.msra.mxu0 0.0
    %162 = vmatpush.msra.mxu0 %v79
    %163 = vmatmul.f32.gmra.mxu0 %v70
    %v164 = vpop.f32.mrf.mxu0
    %v165 = vadd.f32 %v39, %v164
    %166 = vdwg.mxu0
    %167 = vmatpush.msra.mxu0 0.0
    %168 = vmatpush.msra.mxu0 0.0
    %169 = vmatpush.msra.mxu0 0.0
    %170 = vmatpush.msra.mxu0 0.0
    %171 = vmatpush.msra.mxu0 0.0
    %172 = vmatpush.msra.mxu0 0.0
    %173 = vmatpush.msra.mxu0 0.0
    %174 = vmatpush.msra.mxu0 0.0
    %175 = vmatpush.msra.mxu0 0.0
    %176 = vmatpush.msra.mxu0 0.0
    %177 = vmatpush.msra.mxu0 0.0
    %178 = vmatpush.msra.mxu0 0.0
    %179 = vmatpush.msra.mxu0 0.0
    %180 = vmatpush.msra.mxu0 0.0
    %181 = vmatpush.msra.mxu0 0.0
    %182 = vmatpush.msra.mxu0 %v81
    %183 = vmatmul.f32.gmra.mxu0 %v70
    %v184 = vpop.f32.mrf.mxu0
    %v185 = vadd.f32 %v40, %v184
    %186 = vdwg.mxu0
    %187 = vmatpush.msra.mxu0 0.0
    %188 = vmatpush.msra.mxu0 0.0
    %189 = vmatpush.msra.mxu0 0.0
    %190 = vmatpush.msra.mxu0 0.0
    %191 = vmatpush.msra.mxu0 0.0
    %192 = vmatpush.msra.mxu0 0.0
    %193 = vmatpush.msra.mxu0 0.0
    %194 = vmatpush.msra.mxu0 0.0
    %195 = vmatpush.msra.mxu0 0.0
    %196 = vmatpush.msra.mxu0 0.0
    %197 = vmatpush.msra.mxu0 0.0
    %198 = vmatpush.msra.mxu0 0.0
    %199 = vmatpush.msra.mxu0 0.0
    %200 = vmatpush.msra.mxu0 0.0
    %201 = vmatpush.msra.mxu0 0.0
    %202 = vmatpush.msra.mxu0 %v83
    %203 = vmatmul.f32.gmra.mxu0 %v70
    %v204 = vpop.f32.mrf.mxu0
    %v205 = vadd.f32 %v41, %v204
    %206 = vdwg.mxu0
    %207 = vmatpush.msra.mxu0 0.0
    %208 = vmatpush.msra.mxu0 0.0
    %209 = vmatpush.msra.mxu0 0.0
    %210 = vmatpush.msra.mxu0 0.0
    %211 = vmatpush.msra.mxu0 0.0
    %212 = vmatpush.msra.mxu0 0.0
    %213 = vmatpush.msra.mxu0 0.0
    %214 = vmatpush.msra.mxu0 0.0
    %215 = vmatpush.msra.mxu0 0.0
    %216 = vmatpush.msra.mxu0 0.0
    %217 = vmatpush.msra.mxu0 0.0
    %218 = vmatpush.msra.mxu0 0.0
    %219 = vmatpush.msra.mxu0 0.0
    %220 = vmatpush.msra.mxu0 0.0
    %221 = vmatpush.msra.mxu0 0.0
    %222 = vmatpush.msra.mxu0 %v85
    %223 = vmatmul.f32.gmra.mxu0 %v70
    %v224 = vpop.f32.mrf.mxu0
    %v225 = vadd.f32 %v42, %v224
    %226 = vdwg.mxu0
    %v227 = vmul.f32 %v105, 0.5
    %v228 = vmul.f32 %v125, 0.5
    %v229 = vmul.f32 %v145, 0.5
    %v230 = vmul.f32 %v165, 0.5
    %v231 = vmul.f32 %v185, 0.5
    %v232 = vmul.f32 %v205, 0.5
    %v233 = vmul.f32 %v225, 0.5
    %v234 = vtanh.pop %v227
    %v235 = vtanh.pop %v228
    %v236 = vtanh.pop %v229
    %v237 = vtanh.pop %v230
    %v238 = vtanh.pop %v231
    %v239 = vtanh.pop %v232
    %v240 = vtanh.pop %v233
    %v241 = vmul.f32 %v234, 0.5
    %v242 = vmul.f32 %v235, 0.5
    %v243 = vmul.f32 %v236, 0.5
    %v244 = vmul.f32 %v237, 0.5
    %v245 = vmul.f32 %v238, 0.5
    %v246 = vmul.f32 %v239, 0.5
    %v247 = vmul.f32 %v240, 0.5
    %v248 = vadd.f32 %v241, 0.5
    %v249 = vadd.f32 %v242, 0.5
    %v250 = vadd.f32 %v243, 0.5
    %v251 = vadd.f32 %v244, 0.5
    %v252 = vadd.f32 %v245, 0.5
    %v253 = vadd.f32 %v246, 0.5
    %v254 = vadd.f32 %v247, 0.5
    %255 = vst [vmem:[#allocation5] sm:$0xff] %v248
    %256 = vst [vmem:[#allocation5 + $0x8] sm:$0xff] %v249
    %257 = vst [vmem:[#allocation5 + $0x10] sm:$0xff] %v250
    %258 = vst [vmem:[#allocation5 + $0x18] sm:$0xff] %v251
    %259 = vst [vmem:[#allocation5 + $0x20] sm:$0xff] %v252
    %260 = vst [vmem:[#allocation5 + $0x28] sm:$0xff] %v253
    %vm261 = vcmask 130048
    %262 = vst.msk [vmem:[#allocation5 + $0x30] sm:$0xff] %vm261, %v254
    // Predicated region
    $region18: #{tpu_custom_call.1} parent=1 // pred_check
      _
    $region19: #{tpu_custom_call.1} parent=1 // pred_check_branch
      %264 = sbr.rel (0) target = $region21
    $region20: #{tpu_custom_call.1} parent=1 // pred_region
      %266 = vsyncadd [#allocation4], 0
      %s268 = sshll.u32 [#allocation5], 4
      %s269 = int_to_ptr.vmem [resolvable:$true] %s268
      %s270 = sshll.u32 %s3, 4
      %s271 = int_to_ptr.hbm [resolvable:$true] %s270
      %273 = dma.vmem_to_hbm [thread:$0]  %s269, 896, %s271, [#allocation4]
    $region21: #{tpu_custom_call.1} parent=1 // pred_fallthru
      _
    // Predicated region
    $region22: #{tpu_custom_call.1} parent=1 // pred_check
      _
    $region23: #{tpu_custom_call.1} parent=1 // pred_check_branch
      %275 = sbr.rel (0) target = $region25
    $region24: #{tpu_custom_call.1} parent=1 // pred_region
      %277 = dma.done [#allocation4], 896
    $region25: #{tpu_custom_call.1} parent=1 // pred_fallthru
      _
    %278 = vsyncpa [#allocation3], 1
    %279 = vsyncpa [#allocation4], 1

</llo_original>
